<compile_context>
chip_gen: v5e
topology: v5e:2x2
jax: 0.10.0
libtpu: 0.0.40
codegen_flags: <defaults>
</compile_context>

<pallas_src>
import functools

import jax
import jax.numpy as jnp
import numpy as np
from jax.experimental import pallas as pl
from jax.experimental.pallas import tpu as pltpu


def _sep_conv_kernel(x_ref, mw_ref, pw_ref, scale_ref, bias_ref, out_ref, *,
                     shifts, Cin, Cout, NB, use_mxu):
    # x_ref     : (NB*Cin, HW)     flattened input rows (image-major, channel-minor)
    # mw_ref    : (T, NB*Cin, HW)  per-tap (boundary mask * depthwise weight), tiled over NB
    # pw_ref    : (Cin, Cout, 1)   [VPU path]  or  (Cout, Cin)  [MXU path]
    # scale_ref : (Cout, 1)        folded BatchNorm scale
    # bias_ref  : (Cout, 1)        folded BatchNorm bias
    # out_ref   : (NB*Cout, HW)
    x = x_ref[...].astype(jnp.float32)

    # Stage 1: depthwise conv.  Each tap is a lane rotation of the whole slab
    # (XLU slot) times a pre-folded masked weight (one VPU multiply per tap).
    # The folded mask zeroes every position whose source pixel lies outside
    # the image, so the roll wrap-around never contributes.
    acc_dw = None
    for t, s in enumerate(shifts):
        tap = x if s == 0 else pltpu.roll(x, shift=s, axis=1)
        contrib = tap * mw_ref[t]
        acc_dw = contrib if acc_dw is None else acc_dw + contrib

    # Stage 2: pointwise 1x1 conv + folded BatchNorm, per image.  All-f32
    # epilogue with a single cast at the store.
    scale = scale_ref[...]
    bias = bias_ref[...]
    for n in range(NB):
        img = acc_dw[n * Cin:(n + 1) * Cin, :]                       # (Cin, HW)
        if use_mxu:
            res = jnp.dot(pw_ref[...], img,
                          preferred_element_type=jnp.float32)        # (Cout, HW)
        else:
            res = None
            for ci in range(Cin):
                term = pw_ref[ci] * img[ci:ci + 1, :]                # (Cout,1)*(1,HW)
                res = term if res is None else res + term
        out_ref[n * Cout:(n + 1) * Cout, :] = (
            res * scale + bias).astype(out_ref.dtype)


def _pick_images_per_block(N, Cin, Cout, HW, T, target_bytes):
    """Images per grid step.

    Constraints: block row counts must be multiples of 8 (or cover the full
    array), live blocks (x/out double-buffered + resident folded weights) must
    fit the VMEM target, and we prefer >= 2 grid steps so v7x can shard the
    'parallel' axis across both TensorCores.
    """
    def rows_ok(nb):
        return nb == N or ((nb * Cin) % 8 == 0 and (nb * Cout) % 8 == 0)

    def block_bytes(nb):
        return 4 * (2 * nb * Cin * HW + 2 * nb * Cout * HW + T * nb * Cin * HW)

    cands = [d for d in range(1, N + 1)
             if N % d == 0 and d <= 16 and rows_ok(d)
             and block_bytes(d) <= target_bytes]
    if not cands:
        return N                      # whole batch: full-dim blocks are always legal
    multi = [d for d in cands if N // d >= 2]
    return max(multi) if multi else max(cands)


def separable_conv_bn(x_nchw, dw, pw, bn_scale, bn_bias, *,
                      kernel_size, stride, padding, dilation,
                      images_per_block=None):
    """Depthwise KxK conv -> 1x1 conv -> folded BatchNorm (inference).

    x_nchw: (N, Cin, H, W).  dw: (KH, KW, Cin).  pw: (Cin, Cout).
    Returns (N, Cout, H_out, W_out) in NCHW.  No ReLU (matches the reference).
    """
    N, Cin, H, W = x_nchw.shape
    KH = KW = kernel_size
    Cout = pw.shape[1]
    HW = H * W
    T = KH * KW

    H_out = (H + 2 * padding - dilation * (KH - 1) - 1) // stride + 1
    W_out = (W + 2 * padding - dilation * (KW - 1) - 1) // stride + 1
    # The kernel evaluates the stride-1 convolution on the full HxW grid; the
    # wrapper subsamples for stride > 1, which requires the strided output
    # positions to fall inside that grid (true for "same"/"valid" setups).
    if (H_out - 1) * stride > H - 1 or (W_out - 1) * stride > W - 1:
        raise NotImplementedError(
            "padding larger than the conv window is not supported")

    # Generation-aware VMEM budgeting (v7x: 64 MiB/TC, v5e/v6e: 128 MiB).
    try:
        vmem_cap = int(getattr(pltpu.get_tpu_info(), "vmem_capacity_bytes", 0)
                       or (64 * 1024 * 1024))
    except Exception:
        vmem_cap = 64 * 1024 * 1024
    target_bytes = max(4 * 1024 * 1024, min(vmem_cap // 4, 32 * 1024 * 1024))
    vmem_limit = min(vmem_cap // 2, 64 * 1024 * 1024)

    if images_per_block is None:
        nb = _pick_images_per_block(N, Cin, Cout, HW, T, target_bytes)
    else:
        if N % images_per_block:
            raise ValueError("images_per_block must divide the batch size")
        nb = images_per_block
    grid = (N // nb,)

    # Host-side precompute (tiny): per-tap lane-roll shifts and folded
    # (boundary mask * depthwise weight) slabs, tiled over the images in a block.
    hh = np.arange(H)[:, None]
    ww = np.arange(W)[None, :]
    shifts = []
    mask_rows = []
    for kh in range(KH):
        for kw in range(KW):
            dh = kh * dilation - padding
            dwo = kw * dilation - padding
            shifts.append((-(dh * W + dwo)) % HW)
            m = ((hh + dh >= 0) & (hh + dh < H) &
                 (ww + dwo >= 0) & (ww + dwo < W))
            mask_rows.append(m.reshape(HW))
    masks = jnp.asarray(np.stack(mask_rows).astype(np.float32))       # (T, HW)
    dw_t = dw.reshape(T, Cin).astype(jnp.float32)                     # (T, Cin)
    mw = dw_t[:, :, None] * masks[:, None, :]                         # (T, Cin, HW)
    mw = jnp.tile(mw, (1, nb, 1))                                     # (T, nb*Cin, HW)
    # TODO(synk): for very large Cin keep mask (T,1,HW) and weight (T,Cin,1)
    #             separate instead of materializing the folded (T,Cin,HW) slab.

    # Pointwise weights: VPU unroll for tiny channel counts, MXU matmul once
    # Cin/Cout are big enough to amortize the systolic push/pop latency.
    use_mxu = Cin >= 64 and Cout >= 64
    if use_mxu:
        pw_k = jnp.transpose(pw, (1, 0)).astype(jnp.float32)          # (Cout, Cin)
        pw_spec = pl.BlockSpec((Cout, Cin), lambda b: (0, 0))
    else:
        pw_k = pw[:, :, None].astype(jnp.float32)                     # (Cin, Cout, 1)
        pw_spec = pl.BlockSpec((Cin, Cout, 1), lambda b: (0, 0, 0))

    scale_k = bn_scale.reshape(Cout, 1).astype(jnp.float32)
    bias_k = bn_bias.reshape(Cout, 1).astype(jnp.float32)

    # NCHW -> (N*Cin, H*W): contiguous reshape, N*C packed densely on sublanes.
    x_rows = x_nchw.reshape(N * Cin, HW)

    kernel = functools.partial(
        _sep_conv_kernel, shifts=tuple(shifts), Cin=Cin, Cout=Cout, NB=nb,
        use_mxu=use_mxu)

    flops = 2 * N * HW * Cin * (T + Cout) + 2 * N * HW * Cout
    bytes_accessed = 4 * (N * Cin * HW + N * Cout * HW
                          + T * nb * Cin * HW + Cin * Cout + 2 * Cout)

    out_rows = pl.pallas_call(
        kernel,
        out_shape=jax.ShapeDtypeStruct((N * Cout, HW), x_nchw.dtype),
        grid_spec=pltpu.PrefetchScalarGridSpec(
            num_scalar_prefetch=0,
            grid=grid,
            in_specs=[
                pl.BlockSpec((nb * Cin, HW), lambda b: (b, 0)),
                pl.BlockSpec((T, nb * Cin, HW), lambda b: (0, 0, 0)),
                pw_spec,
                pl.BlockSpec((Cout, 1), lambda b: (0, 0)),
                pl.BlockSpec((Cout, 1), lambda b: (0, 0)),
            ],
            out_specs=pl.BlockSpec((nb * Cout, HW), lambda b: (b, 0)),
        ),
        compiler_params=pltpu.CompilerParams(
            dimension_semantics=("parallel",),
            vmem_limit_bytes=vmem_limit,
        ),
        cost_estimate=pl.CostEstimate(
            flops=flops, transcendentals=0, bytes_accessed=bytes_accessed),
    )(x_rows, mw, pw_k, scale_k, bias_k)

    y = out_rows.reshape(N, Cout, H, W)
    if stride != 1 or H_out != H or W_out != W:
        # TODO(synk): subsample inside the kernel epilogue to cut HBM writes.
        y = y[:, :, ::stride, ::stride][:, :, :H_out, :W_out]
    return y


def _reference(x_nchw, dw, pw, bn_scale, bn_bias, *, kernel_size, stride,
               padding, dilation):
    Cin = x_nchw.shape[1]
    dw_oihw = jnp.transpose(dw, (2, 0, 1))[:, None, :, :]             # (Cin,1,KH,KW)
    y = jax.lax.conv_general_dilated(
        x_nchw, dw_oihw, window_strides=(stride, stride),
        padding=[(padding, padding), (padding, padding)],
        rhs_dilation=(dilation, dilation), feature_group_count=Cin,
        dimension_numbers=("NCHW", "OIHW", "NCHW"))
    pw_oihw = jnp.transpose(pw, (1, 0))[:, :, None, None]             # (Cout,Cin,1,1)
    y = jax.lax.conv_general_dilated(
        y, pw_oihw, window_strides=(1, 1), padding="VALID",
        dimension_numbers=("NCHW", "OIHW", "NCHW"))
    return y * bn_scale[None, :, None, None] + bn_bias[None, :, None, None]


if __name__ == "__main__":
    # Module hyper-parameters (depthwise 3x3, same padding, stride 1).
    N, Cin, H, W = 2, 4, 16, 16
    Cout = 8
    kernel_size, stride, padding, dilation = 3, 1, 1, 1
    eps = 1e-5

    key = jax.random.PRNGKey(0)
    k_x, k_dw, k_pw, k_g, k_b, k_m, k_v = jax.random.split(key, 7)

    x = jax.random.normal(k_x, (N, Cin, H, W), jnp.float32)

    # PyTorch depthwise weight is (Cin, 1, KH, KW) -> stored here as (KH, KW, Cin).
    dw = 0.1 * jax.random.normal(k_dw, (kernel_size, kernel_size, Cin), jnp.float32)
    # PyTorch pointwise weight is (Cout, Cin, 1, 1) -> stored here as (Cin, Cout).
    pw = 0.1 * jax.random.normal(k_pw, (Cin, Cout), jnp.float32)
    # BatchNorm2d(out_channels) parameters + running stats (inference mode).
    gamma = 1.0 + 0.1 * jax.random.normal(k_g, (Cout,), jnp.float32)
    beta = 0.1 * jax.random.normal(k_b, (Cout,), jnp.float32)
    running_mean = 0.1 * jax.random.normal(k_m, (Cout,), jnp.float32)
    running_var = 1.0 + 0.1 * jnp.abs(jax.random.normal(k_v, (Cout,), jnp.float32))

    bn_scale = gamma / jnp.sqrt(running_var + eps)
    bn_bias = beta - running_mean * bn_scale

    out = separable_conv_bn(
        x, dw, pw, bn_scale, bn_bias,
        kernel_size=kernel_size, stride=stride, padding=padding,
        dilation=dilation)
    out = jax.block_until_ready(out)

    ref = _reference(
        x, dw, pw, bn_scale, bn_bias,
        kernel_size=kernel_size, stride=stride, padding=padding,
        dilation=dilation)

    assert out.shape == (N, Cout, H, W), out.shape
    max_err = float(jnp.max(jnp.abs(out - ref)))
    assert jnp.allclose(out, ref, atol=1e-4, rtol=1e-4), max_err
    print("KERNEL_OK")
</pallas_src>

<mosaic_0001>
module attributes {stable_mosaic.version = 11 : i64} {
  func.func @_sep_conv_kernel(%arg0: i32, %arg1: memref<8x256xf32, #tpu.memory_space<vmem>>, %arg2: memref<9x8x256xf32, #tpu.memory_space<vmem>>, %arg3: memref<4x8x1xf32, #tpu.memory_space<vmem>>, %arg4: memref<8x1xf32, #tpu.memory_space<vmem>>, %arg5: memref<8x1xf32, #tpu.memory_space<vmem>>, %arg6: memref<16x256xf32, #tpu.memory_space<vmem>>) attributes {dimension_semantics = [#tpu.dimension_semantics<parallel>], iteration_bounds = array<i64: 1>, scalar_prefetch = 0 : i64, scratch_operands = 0 : i64, tpu.core_type = #tpu.core_type<tc>, window_params = [{transform_indices = @transform_0, window_bounds = array<i64: 8, 256>}, {pipeline_mode = #tpu.pipeline_mode<synchronous>, transform_indices = @transform_1, window_bounds = array<i64: 9, 8, 256>}, {pipeline_mode = #tpu.pipeline_mode<synchronous>, transform_indices = @transform_2, window_bounds = array<i64: 4, 8, 1>}, {pipeline_mode = #tpu.pipeline_mode<synchronous>, transform_indices = @transform_3, window_bounds = array<i64: 8, 1>}, {pipeline_mode = #tpu.pipeline_mode<synchronous>, transform_indices = @transform_4, window_bounds = array<i64: 8, 1>}, {transform_indices = @transform_5, window_bounds = array<i64: 16, 256>}]} {
    %c0 = arith.constant 0 : index
    %c0_0 = arith.constant 0 : index
    %0 = vector.load %arg1[%c0, %c0_0] : memref<8x256xf32, #tpu.memory_space<vmem>>, vector<8x256xf32>
    %c17_i32 = arith.constant 17 : i32
    %1 = tpu.dynamic_rotate %0 by %c17_i32 dim 1 : vector<8x256xf32>, i32 -> vector<8x256xf32>
    %c0_1 = arith.constant 0 : index
    %c0_2 = arith.constant 0 : index
    %c0_3 = arith.constant 0 : index
    %2 = vector.load %arg2[%c0_1, %c0_2, %c0_3] : memref<9x8x256xf32, #tpu.memory_space<vmem>>, vector<1x8x256xf32>
    %3 = vector.shape_cast %2 : vector<1x8x256xf32> to vector<8x256xf32>
    %4 = arith.mulf %1, %3 : vector<8x256xf32>
    %c16_i32 = arith.constant 16 : i32
    %5 = tpu.dynamic_rotate %0 by %c16_i32 dim 1 : vector<8x256xf32>, i32 -> vector<8x256xf32>
    %c1 = arith.constant 1 : index
    %c0_4 = arith.constant 0 : index
    %c0_5 = arith.constant 0 : index
    %6 = vector.load %arg2[%c1, %c0_4, %c0_5] : memref<9x8x256xf32, #tpu.memory_space<vmem>>, vector<1x8x256xf32>
    %7 = vector.shape_cast %6 : vector<1x8x256xf32> to vector<8x256xf32>
    %8 = arith.mulf %5, %7 : vector<8x256xf32>
    %9 = arith.addf %4, %8 : vector<8x256xf32>
    %c15_i32 = arith.constant 15 : i32
    %10 = tpu.dynamic_rotate %0 by %c15_i32 dim 1 : vector<8x256xf32>, i32 -> vector<8x256xf32>
    %c2 = arith.constant 2 : index
    %c0_6 = arith.constant 0 : index
    %c0_7 = arith.constant 0 : index
    %11 = vector.load %arg2[%c2, %c0_6, %c0_7] : memref<9x8x256xf32, #tpu.memory_space<vmem>>, vector<1x8x256xf32>
    %12 = vector.shape_cast %11 : vector<1x8x256xf32> to vector<8x256xf32>
    %13 = arith.mulf %10, %12 : vector<8x256xf32>
    %14 = arith.addf %9, %13 : vector<8x256xf32>
    %c1_i32 = arith.constant 1 : i32
    %15 = tpu.dynamic_rotate %0 by %c1_i32 dim 1 : vector<8x256xf32>, i32 -> vector<8x256xf32>
    %c3 = arith.constant 3 : index
    %c0_8 = arith.constant 0 : index
    %c0_9 = arith.constant 0 : index
    %16 = vector.load %arg2[%c3, %c0_8, %c0_9] : memref<9x8x256xf32, #tpu.memory_space<vmem>>, vector<1x8x256xf32>
    %17 = vector.shape_cast %16 : vector<1x8x256xf32> to vector<8x256xf32>
    %18 = arith.mulf %15, %17 : vector<8x256xf32>
    %19 = arith.addf %14, %18 : vector<8x256xf32>
    %c4 = arith.constant 4 : index
    %c0_10 = arith.constant 0 : index
    %c0_11 = arith.constant 0 : index
    %20 = vector.load %arg2[%c4, %c0_10, %c0_11] : memref<9x8x256xf32, #tpu.memory_space<vmem>>, vector<1x8x256xf32>
    %21 = vector.shape_cast %20 : vector<1x8x256xf32> to vector<8x256xf32>
    %22 = arith.mulf %0, %21 : vector<8x256xf32>
    %23 = arith.addf %19, %22 : vector<8x256xf32>
    %c255_i32 = arith.constant 255 : i32
    %24 = tpu.dynamic_rotate %0 by %c255_i32 dim 1 : vector<8x256xf32>, i32 -> vector<8x256xf32>
    %c5 = arith.constant 5 : index
    %c0_12 = arith.constant 0 : index
    %c0_13 = arith.constant 0 : index
    %25 = vector.load %arg2[%c5, %c0_12, %c0_13] : memref<9x8x256xf32, #tpu.memory_space<vmem>>, vector<1x8x256xf32>
    %26 = vector.shape_cast %25 : vector<1x8x256xf32> to vector<8x256xf32>
    %27 = arith.mulf %24, %26 : vector<8x256xf32>
    %28 = arith.addf %23, %27 : vector<8x256xf32>
    %c241_i32 = arith.constant 241 : i32
    %29 = tpu.dynamic_rotate %0 by %c241_i32 dim 1 : vector<8x256xf32>, i32 -> vector<8x256xf32>
    %c6 = arith.constant 6 : index
    %c0_14 = arith.constant 0 : index
    %c0_15 = arith.constant 0 : index
    %30 = vector.load %arg2[%c6, %c0_14, %c0_15] : memref<9x8x256xf32, #tpu.memory_space<vmem>>, vector<1x8x256xf32>
    %31 = vector.shape_cast %30 : vector<1x8x256xf32> to vector<8x256xf32>
    %32 = arith.mulf %29, %31 : vector<8x256xf32>
    %33 = arith.addf %28, %32 : vector<8x256xf32>
    %c240_i32 = arith.constant 240 : i32
    %34 = tpu.dynamic_rotate %0 by %c240_i32 dim 1 : vector<8x256xf32>, i32 -> vector<8x256xf32>
    %c7 = arith.constant 7 : index
    %c0_16 = arith.constant 0 : index
    %c0_17 = arith.constant 0 : index
    %35 = vector.load %arg2[%c7, %c0_16, %c0_17] : memref<9x8x256xf32, #tpu.memory_space<vmem>>, vector<1x8x256xf32>
    %36 = vector.shape_cast %35 : vector<1x8x256xf32> to vector<8x256xf32>
    %37 = arith.mulf %34, %36 : vector<8x256xf32>
    %38 = arith.addf %33, %37 : vector<8x256xf32>
    %c239_i32 = arith.constant 239 : i32
    %39 = tpu.dynamic_rotate %0 by %c239_i32 dim 1 : vector<8x256xf32>, i32 -> vector<8x256xf32>
    %c8 = arith.constant 8 : index
    %c0_18 = arith.constant 0 : index
    %c0_19 = arith.constant 0 : index
    %40 = vector.load %arg2[%c8, %c0_18, %c0_19] : memref<9x8x256xf32, #tpu.memory_space<vmem>>, vector<1x8x256xf32>
    %41 = vector.shape_cast %40 : vector<1x8x256xf32> to vector<8x256xf32>
    %42 = arith.mulf %39, %41 : vector<8x256xf32>
    %43 = arith.addf %38, %42 : vector<8x256xf32>
    %c0_20 = arith.constant 0 : index
    %c0_21 = arith.constant 0 : index
    %44 = vector.load %arg4[%c0_20, %c0_21] : memref<8x1xf32, #tpu.memory_space<vmem>>, vector<8x1xf32>
    %c0_22 = arith.constant 0 : index
    %c0_23 = arith.constant 0 : index
    %45 = vector.load %arg5[%c0_22, %c0_23] : memref<8x1xf32, #tpu.memory_space<vmem>>, vector<8x1xf32>
    %46 = vector.extract_strided_slice %43 {offsets = [0, 0], sizes = [4, 256], strides = [1, 1]} : vector<8x256xf32> to vector<4x256xf32>
    %c0_24 = arith.constant 0 : index
    %c0_25 = arith.constant 0 : index
    %c0_26 = arith.constant 0 : index
    %47 = vector.load %arg3[%c0_24, %c0_25, %c0_26] : memref<4x8x1xf32, #tpu.memory_space<vmem>>, vector<1x8x1xf32>
    %48 = vector.shape_cast %47 : vector<1x8x1xf32> to vector<8x1xf32>
    %49 = vector.extract_strided_slice %46 {offsets = [0, 0], sizes = [1, 256], strides = [1, 1]} : vector<4x256xf32> to vector<1x256xf32>
    %50 = vector.broadcast %48 : vector<8x1xf32> to vector<8x256xf32>
    %51 = vector.broadcast %49 : vector<1x256xf32> to vector<8x256xf32>
    %52 = arith.mulf %50, %51 : vector<8x256xf32>
    %c1_27 = arith.constant 1 : index
    %c0_28 = arith.constant 0 : index
    %c0_29 = arith.constant 0 : index
    %53 = vector.load %arg3[%c1_27, %c0_28, %c0_29] : memref<4x8x1xf32, #tpu.memory_space<vmem>>, vector<1x8x1xf32>
    %54 = vector.shape_cast %53 : vector<1x8x1xf32> to vector<8x1xf32>
    %55 = vector.extract_strided_slice %46 {offsets = [1, 0], sizes = [1, 256], strides = [1, 1]} : vector<4x256xf32> to vector<1x256xf32>
    %56 = vector.broadcast %54 : vector<8x1xf32> to vector<8x256xf32>
    %57 = vector.broadcast %55 : vector<1x256xf32> to vector<8x256xf32>
    %58 = arith.mulf %56, %57 : vector<8x256xf32>
    %59 = arith.addf %52, %58 : vector<8x256xf32>
    %c2_30 = arith.constant 2 : index
    %c0_31 = arith.constant 0 : index
    %c0_32 = arith.constant 0 : index
    %60 = vector.load %arg3[%c2_30, %c0_31, %c0_32] : memref<4x8x1xf32, #tpu.memory_space<vmem>>, vector<1x8x1xf32>
    %61 = vector.shape_cast %60 : vector<1x8x1xf32> to vector<8x1xf32>
    %62 = vector.extract_strided_slice %46 {offsets = [2, 0], sizes = [1, 256], strides = [1, 1]} : vector<4x256xf32> to vector<1x256xf32>
    %63 = vector.broadcast %61 : vector<8x1xf32> to vector<8x256xf32>
    %64 = vector.broadcast %62 : vector<1x256xf32> to vector<8x256xf32>
    %65 = arith.mulf %63, %64 : vector<8x256xf32>
    %66 = arith.addf %59, %65 : vector<8x256xf32>
    %c3_33 = arith.constant 3 : index
    %c0_34 = arith.constant 0 : index
    %c0_35 = arith.constant 0 : index
    %67 = vector.load %arg3[%c3_33, %c0_34, %c0_35] : memref<4x8x1xf32, #tpu.memory_space<vmem>>, vector<1x8x1xf32>
    %68 = vector.shape_cast %67 : vector<1x8x1xf32> to vector<8x1xf32>
    %69 = vector.extract_strided_slice %46 {offsets = [3, 0], sizes = [1, 256], strides = [1, 1]} : vector<4x256xf32> to vector<1x256xf32>
    %70 = vector.broadcast %68 : vector<8x1xf32> to vector<8x256xf32>
    %71 = vector.broadcast %69 : vector<1x256xf32> to vector<8x256xf32>
    %72 = arith.mulf %70, %71 : vector<8x256xf32>
    %73 = arith.addf %66, %72 : vector<8x256xf32>
    %74 = vector.broadcast %44 : vector<8x1xf32> to vector<8x256xf32>
    %75 = arith.mulf %73, %74 : vector<8x256xf32>
    %76 = vector.broadcast %45 : vector<8x1xf32> to vector<8x256xf32>
    %77 = arith.addf %75, %76 : vector<8x256xf32>
    %c0_36 = arith.constant 0 : index
    %c0_37 = arith.constant 0 : index
    %78 = vector.load %arg6[%c0_36, %c0_37] : memref<16x256xf32, #tpu.memory_space<vmem>>, vector<8x256xf32>
    tpu.vector_store %arg6[%c0_36, %c0_37], %77 {strides = array<i32>} : memref<16x256xf32, #tpu.memory_space<vmem>>, vector<8x256xf32>,
    %79 = vector.extract_strided_slice %43 {offsets = [4, 0], sizes = [4, 256], strides = [1, 1]} : vector<8x256xf32> to vector<4x256xf32>
    %c0_38 = arith.constant 0 : index
    %c0_39 = arith.constant 0 : index
    %c0_40 = arith.constant 0 : index
    %80 = vector.load %arg3[%c0_38, %c0_39, %c0_40] : memref<4x8x1xf32, #tpu.memory_space<vmem>>, vector<1x8x1xf32>
    %81 = vector.shape_cast %80 : vector<1x8x1xf32> to vector<8x1xf32>
    %82 = vector.extract_strided_slice %79 {offsets = [0, 0], sizes = [1, 256], strides = [1, 1]} : vector<4x256xf32> to vector<1x256xf32>
    %83 = vector.broadcast %81 : vector<8x1xf32> to vector<8x256xf32>
    %84 = vector.broadcast %82 : vector<1x256xf32> to vector<8x256xf32>
    %85 = arith.mulf %83, %84 : vector<8x256xf32>
    %c1_41 = arith.constant 1 : index
    %c0_42 = arith.constant 0 : index
    %c0_43 = arith.constant 0 : index
    %86 = vector.load %arg3[%c1_41, %c0_42, %c0_43] : memref<4x8x1xf32, #tpu.memory_space<vmem>>, vector<1x8x1xf32>
    %87 = vector.shape_cast %86 : vector<1x8x1xf32> to vector<8x1xf32>
    %88 = vector.extract_strided_slice %79 {offsets = [1, 0], sizes = [1, 256], strides = [1, 1]} : vector<4x256xf32> to vector<1x256xf32>
    %89 = vector.broadcast %87 : vector<8x1xf32> to vector<8x256xf32>
    %90 = vector.broadcast %88 : vector<1x256xf32> to vector<8x256xf32>
    %91 = arith.mulf %89, %90 : vector<8x256xf32>
    %92 = arith.addf %85, %91 : vector<8x256xf32>
    %c2_44 = arith.constant 2 : index
    %c0_45 = arith.constant 0 : index
    %c0_46 = arith.constant 0 : index
    %93 = vector.load %arg3[%c2_44, %c0_45, %c0_46] : memref<4x8x1xf32, #tpu.memory_space<vmem>>, vector<1x8x1xf32>
    %94 = vector.shape_cast %93 : vector<1x8x1xf32> to vector<8x1xf32>
    %95 = vector.extract_strided_slice %79 {offsets = [2, 0], sizes = [1, 256], strides = [1, 1]} : vector<4x256xf32> to vector<1x256xf32>
    %96 = vector.broadcast %94 : vector<8x1xf32> to vector<8x256xf32>
    %97 = vector.broadcast %95 : vector<1x256xf32> to vector<8x256xf32>
    %98 = arith.mulf %96, %97 : vector<8x256xf32>
    %99 = arith.addf %92, %98 : vector<8x256xf32>
    %c3_47 = arith.constant 3 : index
    %c0_48 = arith.constant 0 : index
    %c0_49 = arith.constant 0 : index
    %100 = vector.load %arg3[%c3_47, %c0_48, %c0_49] : memref<4x8x1xf32, #tpu.memory_space<vmem>>, vector<1x8x1xf32>
    %101 = vector.shape_cast %100 : vector<1x8x1xf32> to vector<8x1xf32>
    %102 = vector.extract_strided_slice %79 {offsets = [3, 0], sizes = [1, 256], strides = [1, 1]} : vector<4x256xf32> to vector<1x256xf32>
    %103 = vector.broadcast %101 : vector<8x1xf32> to vector<8x256xf32>
    %104 = vector.broadcast %102 : vector<1x256xf32> to vector<8x256xf32>
    %105 = arith.mulf %103, %104 : vector<8x256xf32>
    %106 = arith.addf %99, %105 : vector<8x256xf32>
    %107 = vector.broadcast %44 : vector<8x1xf32> to vector<8x256xf32>
    %108 = arith.mulf %106, %107 : vector<8x256xf32>
    %109 = vector.broadcast %45 : vector<8x1xf32> to vector<8x256xf32>
    %110 = arith.addf %108, %109 : vector<8x256xf32>
    %c8_50 = arith.constant 8 : index
    %c0_51 = arith.constant 0 : index
    %111 = vector.load %arg6[%c8_50, %c0_51] : memref<16x256xf32, #tpu.memory_space<vmem>>, vector<8x256xf32>
    tpu.vector_store %arg6[%c8_50, %c0_51], %110 {strides = array<i32>} : memref<16x256xf32, #tpu.memory_space<vmem>>, vector<8x256xf32>,
    return
  }
  func.func @transform_0(%arg0: i32) -> (i32, i32) {
    %c0_i32 = arith.constant 0 : i32
    %c0_i32_0 = arith.constant 0 : i32
    return %arg0, %c0_i32 : i32, i32
  }
  func.func @transform_1(%arg0: i32) -> (i32, i32, i32) {
    %c0_i32 = arith.constant 0 : i32
    %c0_i32_0 = arith.constant 0 : i32
    %c0_i32_1 = arith.constant 0 : i32
    %c0_i32_2 = arith.constant 0 : i32
    return %c0_i32, %c0_i32_0, %c0_i32_1 : i32, i32, i32
  }
  func.func @transform_2(%arg0: i32) -> (i32, i32, i32) {
    %c0_i32 = arith.constant 0 : i32
    %c0_i32_0 = arith.constant 0 : i32
    %c0_i32_1 = arith.constant 0 : i32
    %c0_i32_2 = arith.constant 0 : i32
    return %c0_i32, %c0_i32_0, %c0_i32_1 : i32, i32, i32
  }
  func.func @transform_3(%arg0: i32) -> (i32, i32) {
    %c0_i32 = arith.constant 0 : i32
    %c0_i32_0 = arith.constant 0 : i32
    %c0_i32_1 = arith.constant 0 : i32
    return %c0_i32, %c0_i32_0 : i32, i32
  }
  func.func @transform_4(%arg0: i32) -> (i32, i32) {
    %c0_i32 = arith.constant 0 : i32
    %c0_i32_0 = arith.constant 0 : i32
    %c0_i32_1 = arith.constant 0 : i32
    return %c0_i32, %c0_i32_0 : i32, i32
  }
  func.func @transform_5(%arg0: i32) -> (i32, i32) {
    %c0_i32 = arith.constant 0 : i32
    %c0_i32_0 = arith.constant 0 : i32
    return %arg0, %c0_i32 : i32, i32
  }
}

</mosaic_0001>

<llo_original>
// kernel: tpu_custom_call.1
$region0: #{tpu_custom_call.1}
  #allocation0 [shape = 'u32[]', space=smem, size = 0x4, offset = 0x4, fixed_abs, tag = 'smem constant byte address 0x4 - core index']
  #allocation1 [shape = 'u32[72,128]{1,0:T(1,128)}', space=vmem, size = 0x9000, scoped, tag = 'internal scratch']
  %s0 = inlined_call_operand.vmem [shape: f32[8,256], index: 0, kind: input, shape index: {}]
  %s1 = inlined_call_operand.hbm [shape: f32[9,8,256], index: 1, kind: input, shape index: {}]
  %s2 = inlined_call_operand.vmem [shape: f32[4,8,1], index: 2, kind: input, shape index: {}]
  %s3 = inlined_call_operand.vmem [shape: f32[8,1], index: 3, kind: input, shape index: {}]
  %s4 = inlined_call_operand.vmem [shape: f32[8,1], index: 4, kind: input, shape index: {}]
  %s5 = inlined_call_operand.hbm [shape: f32[16,256], index: 5, kind: output, shape index: {}]
  %s6 = sld [smem:[#allocation0]]
  $region34: #{tpu_custom_call.1} parent=0
    _
  %s8 = ssub.s32 1, %s6
  %s9 = scalar_select 0, %s8, %s6
  $region1: #{tpu_custom_call.1} parent=0
    #allocation2 [shape = 'u8[73728]{0}', space=vmem, size = 0x12000, scoped, tag = 'input window, operand 1, single buffered']
    #allocation3 [shape = 's32[1]{0}', space=sflag, size = 0x4, scoped, tag = 'scoped memory for tpu_custom_call.1']
    #allocation4 [shape = 's32[1]{0}', space=sflag, size = 0x4, scoped, tag = 'scoped memory for tpu_custom_call.1']
    #allocation5 [shape = 'u8[16384]{0}', space=vmem, size = 0x4000, scoped, tag = 'output window, operand 0, single buffered']
    %10 = vsyncpa [#allocation3], 0
    %11 = vsyncpa [#allocation4], 0
    // Predicated region
    $region2: #{tpu_custom_call.1} parent=1 // pred_check
      _
    $region3: #{tpu_custom_call.1} parent=1 // pred_check_branch
      %13 = sbr.rel (0) target = $region5
    $region4: #{tpu_custom_call.1} parent=1 // pred_region
      _
    $region5: #{tpu_custom_call.1} parent=1 // pred_fallthru
      _
    // Predicated region
    $region6: #{tpu_custom_call.1} parent=1 // pred_check
      _
    $region7: #{tpu_custom_call.1} parent=1 // pred_check_branch
      %15 = sbr.rel (0) target = $region9
    $region8: #{tpu_custom_call.1} parent=1 // pred_region
      %17 = vsyncadd [#allocation3], 0
      %s18 = sshll.u32 %s1, 4
      %s19 = int_to_ptr.hbm [resolvable:$true] %s18
      %s20 = sshll.u32 [#allocation2], 4
      %s21 = int_to_ptr.vmem [resolvable:$true] %s20
      %26 = dma.hbm_to_vmem [thread:$0]  %s19, 2304, %s21, [#allocation3], 256, 256, 16
    $region9: #{tpu_custom_call.1} parent=1 // pred_fallthru
      _
    // Predicated region
    $region10: #{tpu_custom_call.1} parent=1 // pred_check
      _
    $region11: #{tpu_custom_call.1} parent=1 // pred_check_branch
      %28 = sbr.rel (0) target = $region13
    $region12: #{tpu_custom_call.1} parent=1 // pred_region
      _
    $region13: #{tpu_custom_call.1} parent=1 // pred_fallthru
      _
    // Predicated region
    $region14: #{tpu_custom_call.1} parent=1 // pred_check
      _
    $region15: #{tpu_custom_call.1} parent=1 // pred_check_branch
      %30 = sbr.rel (0) target = $region17
    $region16: #{tpu_custom_call.1} parent=1 // pred_region
      _
    $region17: #{tpu_custom_call.1} parent=1 // pred_fallthru
      _
    // Predicated region
    $region18: #{tpu_custom_call.1} parent=1 // pred_check
      _
    $region19: #{tpu_custom_call.1} parent=1 // pred_check_branch
      %32 = sbr.rel (0) target = $region21
    $region20: #{tpu_custom_call.1} parent=1 // pred_region
      _
    $region21: #{tpu_custom_call.1} parent=1 // pred_fallthru
      _
    // Predicated region
    $region22: #{tpu_custom_call.1} parent=1 // pred_check
      _
    $region23: #{tpu_custom_call.1} parent=1 // pred_check_branch
      %34 = sbr.rel (0) target = $region25
    $region24: #{tpu_custom_call.1} parent=1 // pred_region
      %36 = dma.done [#allocation3], 2304
    $region25: #{tpu_custom_call.1} parent=1 // pred_fallthru
      _
    %v37 = vld [vmem:[%s0] sm:$0xff]
    %v38 = vld [vmem:[%s0 + $0x8] sm:$0xff]
    %39 = vrot.lane.b32.xlu0 %v37, 17
    %v40 = vpop.permute.xlu0 %39
    %41 = vrot.lane.b32.xlu0 %v38, 17
    %v42 = vpop.permute.xlu0 %41
    %v43 = vlaneseq
    %v44 = vand.u32 %v43, 127
    %vm45 = vcmp.lt.s32.totalorder %v44, 17
    %v46 = vsel %vm45, %v40, %v42
    %v47 = vsel %vm45, %v42, %v40
    %v48 = vld [vmem:[#allocation2] sm:$0xff]
    %v49 = vld [vmem:[#allocation2 + $0x8] sm:$0xff]
    %v50 = vmul.f32 %v47, %v48
    %v51 = vmul.f32 %v46, %v49
    %52 = vrot.lane.b32.xlu0 %v37, 16
    %v53 = vpop.permute.xlu0 %52
    %54 = vrot.lane.b32.xlu0 %v38, 16
    %v55 = vpop.permute.xlu0 %54
    %vm56 = vcmp.lt.s32.totalorder %v44, 16
    %v57 = vsel %vm56, %v53, %v55
    %v58 = vsel %vm56, %v55, %v53
    %s59 = scalar_lea.vmem [#allocation2], 16
    %v60 = vld [vmem:[%s59] sm:$0xff]
    %v61 = vld [vmem:[%s59 + $0x8] sm:$0xff]
    %v62 = vmul.f32 %v58, %v60
    %v63 = vmul.f32 %v57, %v61
    %v64 = vadd.f32 %v50, %v62
    %v65 = vadd.f32 %v51, %v63
    %66 = vrot.lane.b32.xlu0 %v37, 15
    %v67 = vpop.permute.xlu0 %66
    %68 = vrot.lane.b32.xlu0 %v38, 15
    %v69 = vpop.permute.xlu0 %68
    %vm70 = vcmp.lt.s32.totalorder %v44, 15
    %v71 = vsel %vm70, %v67, %v69
    %v72 = vsel %vm70, %v69, %v67
    %s73 = scalar_lea.vmem [#allocation2], 32
    %v74 = vld [vmem:[%s73] sm:$0xff]
    %v75 = vld [vmem:[%s73 + $0x8] sm:$0xff]
    %v76 = vmul.f32 %v72, %v74
    %v77 = vmul.f32 %v71, %v75
    %v78 = vadd.f32 %v64, %v76
    %v79 = vadd.f32 %v65, %v77
    %80 = vrot.lane.b32.xlu0 %v37, 1
    %v81 = vpop.permute.xlu0 %80
    %82 = vrot.lane.b32.xlu0 %v38, 1
    %v83 = vpop.permute.xlu0 %82
    %vm84 = vcmp.lt.s32.totalorder %v44, 1
    %v85 = vsel %vm84, %v81, %v83
    %v86 = vsel %vm84, %v83, %v81
    %s87 = scalar_lea.vmem [#allocation2], 48
    %v88 = vld [vmem:[%s87] sm:$0xff]
    %v89 = vld [vmem:[%s87 + $0x8] sm:$0xff]
    %v90 = vmul.f32 %v86, %v88
    %v91 = vmul.f32 %v85, %v89
    %v92 = vadd.f32 %v78, %v90
    %v93 = vadd.f32 %v79, %v91
    %s94 = scalar_lea.vmem [#allocation2], 64
    %v95 = vld [vmem:[%s94] sm:$0xff]
    %v96 = vld [vmem:[%s94 + $0x8] sm:$0xff]
    %v97 = vmul.f32 %v37, %v95
    %v98 = vmul.f32 %v38, %v96
    %v99 = vadd.f32 %v92, %v97
    %v100 = vadd.f32 %v93, %v98
    %101 = vrot.lane.b32.xlu0 %v37, 127
    %v102 = vpop.permute.xlu0 %101
    %103 = vrot.lane.b32.xlu0 %v38, 127
    %v104 = vpop.permute.xlu0 %103
    %vm105 = vcmp.lt.s32.totalorder %v44, 127
    %v106 = vsel %vm105, %v102, %v104
    %v107 = vsel %vm105, %v104, %v102
    %s108 = scalar_lea.vmem [#allocation2], 80
    %v109 = vld [vmem:[%s108] sm:$0xff]
    %v110 = vld [vmem:[%s108 + $0x8] sm:$0xff]
    %v111 = vmul.f32 %v106, %v109
    %v112 = vmul.f32 %v107, %v110
    %v113 = vadd.f32 %v99, %v111
    %v114 = vadd.f32 %v100, %v112
    %115 = vrot.lane.b32.xlu0 %v37, 113
    %v116 = vpop.permute.xlu0 %115
    %117 = vrot.lane.b32.xlu0 %v38, 113
    %v118 = vpop.permute.xlu0 %117
    %vm119 = vcmp.lt.s32.totalorder %v44, 113
    %v120 = vsel %vm119, %v116, %v118
    %v121 = vsel %vm119, %v118, %v116
    %s122 = scalar_lea.vmem [#allocation2], 96
    %v123 = vld [vmem:[%s122] sm:$0xff]
    %v124 = vld [vmem:[%s122 + $0x8] sm:$0xff]
    %v125 = vmul.f32 %v120, %v123
    %v126 = vmul.f32 %v121, %v124
    %v127 = vadd.f32 %v113, %v125
    %v128 = vadd.f32 %v114, %v126
    %129 = vrot.lane.b32.xlu0 %v37, 112
    %v130 = vpop.permute.xlu0 %129
    %131 = vrot.lane.b32.xlu0 %v38, 112
    %v132 = vpop.permute.xlu0 %131
    %vm133 = vcmp.lt.s32.totalorder %v44, 112
    %v134 = vsel %vm133, %v130, %v132
    %v135 = vsel %vm133, %v132, %v130
    %s136 = scalar_lea.vmem [#allocation2], 112
    %v137 = vld [vmem:[%s136] sm:$0xff]
    %v138 = vld [vmem:[%s136 + $0x8] sm:$0xff]
    %v139 = vmul.f32 %v134, %v137
    %v140 = vmul.f32 %v135, %v138
    %v141 = vadd.f32 %v127, %v139
    %v142 = vadd.f32 %v128, %v140
    %143 = vrot.lane.b32.xlu0 %v37, 111
    %v144 = vpop.permute.xlu0 %143
    %145 = vrot.lane.b32.xlu0 %v38, 111
    %v146 = vpop.permute.xlu0 %145
    %vm147 = vcmp.lt.s32.totalorder %v44, 111
    %v148 = vsel %vm147, %v144, %v146
    %v149 = vsel %vm147, %v146, %v144
    %s150 = scalar_lea.vmem [#allocation2], 128
    %v151 = vld [vmem:[%s150] sm:$0xff]
    %v152 = vld [vmem:[%s150 + $0x8] sm:$0xff]
    %v153 = vmul.f32 %v148, %v151
    %v154 = vmul.f32 %v149, %v152
    %v155 = vadd.f32 %v141, %v153
    %v156 = vadd.f32 %v142, %v154
    %v157 = vld [vmem:[%s3] sm:$0xff]
    %v158 = vld [vmem:[%s4] sm:$0xff]
    %v159 = vld [vmem:[%s2] sm:$0xff]
    %161 = vset.pattern.permute.xlu0 0
    %162 = vperm.xlu0 %161, %v159
    %v163 = vpop.permute.xlu0 %162
    %v165 = vperm.slane %v155, 0
    %v166 = vperm.slane %v156, 0
    %v167 = vmul.f32 %v163, %v165
    %v168 = vmul.f32 %v163, %v166
    %s169 = scalar_lea.vmem %s2, 8
    %v170 = vld [vmem:[%s169] sm:$0xff]
    %172 = vset.pattern.permute.xlu0 0
    %173 = vperm.xlu0 %172, %v170
    %v174 = vpop.permute.xlu0 %173
    %v176 = vperm.slane %v155, 1
    %v177 = vperm.slane %v156, 1
    %v178 = vmul.f32 %v174, %v176
    %v179 = vmul.f32 %v174, %v177
    %v180 = vadd.f32 %v167, %v178
    %v181 = vadd.f32 %v168, %v179
    %s182 = scalar_lea.vmem %s2, 16
    %v183 = vld [vmem:[%s182] sm:$0xff]
    %185 = vset.pattern.permute.xlu0 0
    %186 = vperm.xlu0 %185, %v183
    %v187 = vpop.permute.xlu0 %186
    %v189 = vperm.slane %v155, 2
    %v190 = vperm.slane %v156, 2
    %v191 = vmul.f32 %v187, %v189
    %v192 = vmul.f32 %v187, %v190
    %v193 = vadd.f32 %v180, %v191
    %v194 = vadd.f32 %v181, %v192
    %s195 = scalar_lea.vmem %s2, 24
    %v196 = vld [vmem:[%s195] sm:$0xff]
    %198 = vset.pattern.permute.xlu0 0
    %199 = vperm.xlu0 %198, %v196
    %v200 = vpop.permute.xlu0 %199
    %v202 = vperm.slane %v155, 3
    %v203 = vperm.slane %v156, 3
    %v204 = vmul.f32 %v200, %v202
    %v205 = vmul.f32 %v200, %v203
    %v206 = vadd.f32 %v193, %v204
    %v207 = vadd.f32 %v194, %v205
    %209 = vset.pattern.permute.xlu0 0
    %210 = vperm.xlu0 %209, %v157
    %v211 = vpop.permute.xlu0 %210
    %v213 = vmul.f32 %v206, %v211
    %v214 = vmul.f32 %v207, %v211
    %216 = vset.pattern.permute.xlu0 0
    %217 = vperm.xlu0 %216, %v158
    %v218 = vpop.permute.xlu0 %217
    %v220 = vadd.f32 %v213, %v218
    %v221 = vadd.f32 %v214, %v218
    %222 = vst [vmem:[#allocation5] sm:$0xff] %v220
    %223 = vst [vmem:[#allocation5 + $0x8] sm:$0xff] %v221
    %v224 = vld [vmem:[%s2] sm:$0xff]
    %226 = vset.pattern.permute.xlu0 0
    %227 = vperm.xlu0 %226, %v224
    %v228 = vpop.permute.xlu0 %227
    %v230 = vperm.slane %v155, 4
    %v231 = vperm.slane %v156, 4
    %v232 = vmul.f32 %v228, %v230
    %v233 = vmul.f32 %v228, %v231
    %v234 = vld [vmem:[%s169] sm:$0xff]
    %236 = vset.pattern.permute.xlu0 0
    %237 = vperm.xlu0 %236, %v234
    %v238 = vpop.permute.xlu0 %237
    %v240 = vperm.slane %v155, 5
    %v241 = vperm.slane %v156, 5
    %v242 = vmul.f32 %v238, %v240
    %v243 = vmul.f32 %v238, %v241
    %v244 = vadd.f32 %v232, %v242
    %v245 = vadd.f32 %v233, %v243
    %v246 = vld [vmem:[%s182] sm:$0xff]
    %248 = vset.pattern.permute.xlu0 0
    %249 = vperm.xlu0 %248, %v246
    %v250 = vpop.permute.xlu0 %249
    %v252 = vperm.slane %v155, 6
    %v253 = vperm.slane %v156, 6
    %v254 = vmul.f32 %v250, %v252
    %v255 = vmul.f32 %v250, %v253
    %v256 = vadd.f32 %v244, %v254
    %v257 = vadd.f32 %v245, %v255
    %v258 = vld [vmem:[%s195] sm:$0xff]
    %260 = vset.pattern.permute.xlu0 0
    %261 = vperm.xlu0 %260, %v258
    %v262 = vpop.permute.xlu0 %261
    %v264 = vperm.slane %v155, 7
    %v265 = vperm.slane %v156, 7
    %v266 = vmul.f32 %v262, %v264
    %v267 = vmul.f32 %v262, %v265
    %v268 = vadd.f32 %v256, %v266
    %v269 = vadd.f32 %v257, %v267
    %v270 = vmul.f32 %v268, %v211
    %v271 = vmul.f32 %v269, %v211
    %v272 = vadd.f32 %v270, %v218
    %v273 = vadd.f32 %v271, %v218
    %274 = vst [vmem:[#allocation5 + $0x10] sm:$0xff] %v272
    %275 = vst [vmem:[#allocation5 + $0x18] sm:$0xff] %v273
    // Predicated region
    $region26: #{tpu_custom_call.1} parent=1 // pred_check
      _
    $region27: #{tpu_custom_call.1} parent=1 // pred_check_branch
      %277 = sbr.rel (0) target = $region29
    $region28: #{tpu_custom_call.1} parent=1 // pred_region
      %279 = vsyncadd [#allocation4], 0
      %s280 = sshll.u32 [#allocation5], 4
      %s281 = int_to_ptr.vmem [resolvable:$true] %s280
      %s282 = sshll.u32 %s5, 4
      %s283 = int_to_ptr.hbm [resolvable:$true] %s282
      %288 = dma.vmem_to_hbm [thread:$0]  %s281, 512, %s283, [#allocation4], 256, 256, 16
    $region29: #{tpu_custom_call.1} parent=1 // pred_fallthru
      _
    // Predicated region
    $region30: #{tpu_custom_call.1} parent=1 // pred_check
      _
    $region31: #{tpu_custom_call.1} parent=1 // pred_check_branch
      %290 = sbr.rel (0) target = $region33
    $region32: #{tpu_custom_call.1} parent=1 // pred_region
      %292 = dma.done [#allocation4], 512
    $region33: #{tpu_custom_call.1} parent=1 // pred_fallthru
      _
    %293 = vsyncpa [#allocation3], 1
    %294 = vsyncpa [#allocation4], 1

</llo_original>
